<compile_context>
chip_gen: v6e
topology: v6e:2x2x1
jax: 0.10.0
libtpu: 0.0.40
codegen_flags: <defaults>
</compile_context>

<pallas_src>
import jax
import jax.numpy as jnp
from jax.experimental import pallas as pl
from jax.experimental.pallas import tpu as pltpu


LANE = 128
SUBLANE = 8
MAX_TILE_D = 2048      # lane tile cap: 256 rows x 2048 x 4B ~= 2 MB/block,
MAX_TILE_ROWS = 256    # well under the 32 MiB scoped-VMEM default on v5e/v6e/v7x
DEPTH_PAD_VALUE = 1e6  # keeps den = -d - s far from zero on padded lanes


def _round_up(x, m):
    return ((x + m - 1) // m) * m


# ------------------------------ Pallas kernel ------------------------------ #
def homography_kernel(const_ref, dep_ref, out_ref):
    """out[r, d] = A[r] + uv[r] / (-d - s[r]).

    const_ref : (TILE_R, 3)    packed per-row constants: col0=A, col1=uv, col2=s
    dep_ref   : (1, TILE_D)    depth proposals (lane axis, padded)
    out_ref   : (TILE_R, TILE_D)
    """
    a = const_ref[:, 0:1]                      # (TILE_R, 1)
    uv = const_ref[:, 1:2]
    s = const_ref[:, 2:3]
    den = -dep_ref[...] - s                    # (TILE_R, TILE_D)
    inv = pl.reciprocal(den, approx=True)      # EUP slot (nearly free)
    inv = inv * (2.0 - den * inv)              # one Newton step -> ~f32-exact
    out_ref[...] = a + uv * inv


# ------------------------------- wrappers ----------------------------------- #
def compute_homography_lane_dense(kmats, r_mats, t_vecs, depth_proposals):
    """Returns homographies in the lane-dense (B, 3, 3, D) layout."""
    kmats = kmats.astype(jnp.float32)              # (B, 3, 3)
    r_mats = r_mats.astype(jnp.float32)            # (B, 3, 3)
    B = kmats.shape[0]
    D = depth_proposals.shape[0]
    t = t_vecs.reshape(B, 3, 1).astype(jnp.float32)
    dep = depth_proposals.reshape(D).astype(jnp.float32)

    # -------- depth-independent per-batch prologue (tiny; stays in XLA) ------
    kinv = jnp.linalg.inv(kmats)                   # (B, 3, 3)
    Rt = jnp.swapaxes(r_mats, 1, 2)                # (B, 3, 3)   R^T
    Rtt = Rt @ t                                   # (B, 3, 1)   R^T t
    A = kmats @ Rt @ kinv                          # (B, 3, 3)   K R^T K^-1
    u = (kmats @ Rtt)[:, :, 0]                     # (B, 3)      K R^T t
    v = (Rt @ kinv)[:, 2, :]                       # (B, 3)      n R^T K^-1
    s = Rtt[:, 2, 0]                               # (B,)        n R^T t
    uv = u[:, :, None] * v[:, None, :]             # (B, 3, 3)   u v^T

    rows = B * 9                                   # row r = b*9 + 3*i + j
    # One packed constants input (single BlockSpec / single DMA per step).
    const = jnp.stack(
        [A.reshape(rows), uv.reshape(rows), jnp.repeat(s, 9)], axis=-1)  # (rows,3)

    # Row (sublane) tiling: pad to a multiple of the row tile (multiple of 8).
    tile_r = min(_round_up(rows, SUBLANE), MAX_TILE_ROWS)
    rows_pad = _round_up(rows, tile_r)
    const = jnp.pad(const, ((0, rows_pad - rows), (0, 0)))   # zero rows -> out=0

    # Depth (lane) tiling: tile the whole padded depth axis when it fits.
    tile_d = min(_round_up(D, LANE), MAX_TILE_D)
    d_pad = _round_up(D, tile_d)
    dep_pad = jnp.pad(dep.reshape(1, D), ((0, 0), (0, d_pad - D)),
                      constant_values=DEPTH_PAD_VALUE)

    out = pl.pallas_call(
        homography_kernel,
        out_shape=jax.ShapeDtypeStruct((rows_pad, d_pad), jnp.float32),
        grid=(rows_pad // tile_r, d_pad // tile_d),
        in_specs=[
            pl.BlockSpec((tile_r, 3), lambda r, d: (r, 0)),
            pl.BlockSpec((1, tile_d), lambda r, d: (0, d)),
        ],
        out_specs=pl.BlockSpec((tile_r, tile_d), lambda r, d: (r, d)),
        compiler_params=pltpu.CompilerParams(
            dimension_semantics=("parallel", "parallel")),
    )(const, dep_pad)

    return out[:rows, :D].reshape(B, 3, 3, D)      # lane-dense, depth last


def compute_homography_pallas(kmats, r_mats, t_vecs, depth_proposals):
    """PyTorch-compatible layout: (B, D, 3, 3)."""
    h = compute_homography_lane_dense(kmats, r_mats, t_vecs, depth_proposals)
    # TODO(synk): downstream plane-sweep/warp consumers should take the
    # lane-dense (B,3,3,D) slab directly (or fuse this rank-1 update) and drop
    # this relayout — it costs more than the kernel at these sizes.
    return jnp.transpose(h, (0, 3, 1, 2))


# --------------------------- pure-JAX reference ----------------------------- #
def compute_homography_ref(kmats, r_mats, t_vecs, depths):
    B = kmats.shape[0]
    D = depths.shape[0]
    kinv = jnp.linalg.inv(kmats)                               # (B,3,3)
    Rt = jnp.swapaxes(r_mats, 1, 2)                            # (B,3,3)
    t = t_vecs.reshape(B, 3, 1)                                # (B,3,1)
    n = jnp.array([0.0, 0.0, 1.0]).reshape(1, 1, 3)            # (1,1,3)
    num1 = (Rt @ t) @ n @ Rt                                   # (B,3,3)
    s = (n @ Rt) @ t                                           # (B,1,1)
    den = -depths.reshape(1, D, 1, 1) - s.reshape(B, 1, 1, 1)  # (B,D,1,1)
    M = Rt[:, None] + num1[:, None] / den                      # (B,D,3,3)
    return kmats[:, None] @ M @ kinv[:, None]                  # (B,D,3,3)


# --------------------------------- main ------------------------------------ #
if __name__ == "__main__":
    class Opts:
        img_wh = (16, 16)
        num_planes = 8
        near_plane = 1.0
        far_plane = 10.0

    opts = Opts()
    B = 2
    D = opts.num_planes
    w, h = opts.img_wh

    # depth proposals: 1 / linspace(1/near, 1/far, num_planes)
    depth_proposals = 1.0 / jnp.linspace(1.0 / opts.near_plane,
                                         1.0 / opts.far_plane,
                                         opts.num_planes).astype(jnp.float32)

    key = jax.random.PRNGKey(0)
    k1, k2, k3 = jax.random.split(key, 3)

    # Intrinsics: plausible, invertible K per batch element
    focal = 0.8 * w + 2.0 * jax.random.uniform(k1, (B,), dtype=jnp.float32)
    kmats = jnp.stack([
        jnp.array([[focal[bi], 0.0, (w - 1) / 2.0],
                   [0.0, focal[bi], (h - 1) / 2.0],
                   [0.0, 0.0, 1.0]], dtype=jnp.float32)
        for bi in range(B)
    ])                                                         # (B,3,3)

    # Small z-axis rotations per batch element
    theta = 0.1 * jax.random.normal(k2, (B,), dtype=jnp.float32)
    r_mats = jnp.stack([
        jnp.array([[jnp.cos(theta[bi]), -jnp.sin(theta[bi]), 0.0],
                   [jnp.sin(theta[bi]), jnp.cos(theta[bi]), 0.0],
                   [0.0, 0.0, 1.0]], dtype=jnp.float32)
        for bi in range(B)
    ])                                                         # (B,3,3)

    t_vecs = 0.2 * jax.random.normal(k3, (B, 3, 1), dtype=jnp.float32)

    h_mats = compute_homography_pallas(kmats, r_mats, t_vecs, depth_proposals)
    h_mats = jax.block_until_ready(h_mats)

    ref = compute_homography_ref(kmats, r_mats, t_vecs, depth_proposals)
    assert h_mats.shape == (B, D, 3, 3), h_mats.shape
    # approx reciprocal + 1 Newton step is ~f32-exact; small slack for the
    # different (but algebraically identical) association of the prologue.
    assert jnp.allclose(h_mats, ref, rtol=5e-4, atol=5e-4), \
        float(jnp.max(jnp.abs(h_mats - ref)))

    print("KERNEL_OK")
</pallas_src>

<mosaic_0001>
module attributes {stable_mosaic.version = 11 : i64} {
  func.func @homography_kernel(%arg0: i32, %arg1: i32, %arg2: memref<24x3xf32, #tpu.memory_space<vmem>>, %arg3: memref<1x128xf32, #tpu.memory_space<vmem>>, %arg4: memref<24x128xf32, #tpu.memory_space<vmem>>) attributes {dimension_semantics = [#tpu.dimension_semantics<parallel>, #tpu.dimension_semantics<parallel>], iteration_bounds = array<i64: 1, 1>, scalar_prefetch = 0 : i64, scratch_operands = 0 : i64, tpu.core_type = #tpu.core_type<tc>, window_params = [{transform_indices = @transform_0, window_bounds = array<i64: 24, 3>}, {transform_indices = @transform_1, window_bounds = array<i64: 1, 128>}, {transform_indices = @transform_2, window_bounds = array<i64: 24, 128>}]} {
    %c0 = arith.constant 0 : index
    %c0_0 = arith.constant 0 : index
    %0 = vector.load %arg2[%c0, %c0_0] : memref<24x3xf32, #tpu.memory_space<vmem>>, vector<24x1xf32>
    %c0_1 = arith.constant 0 : index
    %c1 = arith.constant 1 : index
    %1 = vector.load %arg2[%c0_1, %c1] : memref<24x3xf32, #tpu.memory_space<vmem>>, vector<24x1xf32>
    %c0_2 = arith.constant 0 : index
    %c2 = arith.constant 2 : index
    %2 = vector.load %arg2[%c0_2, %c2] : memref<24x3xf32, #tpu.memory_space<vmem>>, vector<24x1xf32>
    %c0_3 = arith.constant 0 : index
    %c0_4 = arith.constant 0 : index
    %3 = vector.load %arg3[%c0_3, %c0_4] : memref<1x128xf32, #tpu.memory_space<vmem>>, vector<1x128xf32>
    %cst = arith.constant 0.000000e+00 : f32
    %4 = vector.broadcast %cst : f32 to vector<1x128xf32>
    %5 = arith.subf %4, %3 : vector<1x128xf32>
    %6 = vector.broadcast %5 : vector<1x128xf32> to vector<24x128xf32>
    %7 = vector.broadcast %2 : vector<24x1xf32> to vector<24x128xf32>
    %8 = arith.subf %6, %7 : vector<24x128xf32>
    %9 = tpu.reciprocal %8 {approx = true} : vector<24x128xf32> -> vector<24x128xf32>
    %10 = arith.mulf %8, %9 : vector<24x128xf32>
    %cst_5 = arith.constant 2.000000e+00 : f32
    %11 = vector.broadcast %cst_5 : f32 to vector<24x128xf32>
    %12 = arith.subf %11, %10 : vector<24x128xf32>
    %13 = arith.mulf %9, %12 : vector<24x128xf32>
    %14 = vector.broadcast %1 : vector<24x1xf32> to vector<24x128xf32>
    %15 = arith.mulf %14, %13 : vector<24x128xf32>
    %16 = vector.broadcast %0 : vector<24x1xf32> to vector<24x128xf32>
    %17 = arith.addf %16, %15 : vector<24x128xf32>
    %c0_6 = arith.constant 0 : index
    %c0_7 = arith.constant 0 : index
    %18 = vector.load %arg4[%c0_6, %c0_7] : memref<24x128xf32, #tpu.memory_space<vmem>>, vector<24x128xf32>
    tpu.vector_store %arg4[%c0_6, %c0_7], %17 {strides = array<i32>} : memref<24x128xf32, #tpu.memory_space<vmem>>, vector<24x128xf32>,
    return
  }
  func.func @transform_0(%arg0: i32, %arg1: i32) -> (i32, i32) {
    %c0_i32 = arith.constant 0 : i32
    %c0_i32_0 = arith.constant 0 : i32
    return %arg0, %c0_i32 : i32, i32
  }
  func.func @transform_1(%arg0: i32, %arg1: i32) -> (i32, i32) {
    %c0_i32 = arith.constant 0 : i32
    %c0_i32_0 = arith.constant 0 : i32
    return %c0_i32, %arg1 : i32, i32
  }
  func.func @transform_2(%arg0: i32, %arg1: i32) -> (i32, i32) {
    %c0_i32 = arith.constant 0 : i32
    return %arg0, %arg1 : i32, i32
  }
}

</mosaic_0001>

<llo_original>
// kernel: tpu_custom_call.1
$region0: #{tpu_custom_call.1}
  #allocation0 [shape = 'u32[]', space=smem, size = 0x4, offset = 0x4, fixed_abs, tag = 'smem constant byte address 0x4 - core index']
  #allocation1 [shape = 'u32[144,128]{1,0:T(1,128)}', space=vmem, size = 0x12000, scoped, tag = 'internal scratch']
  %s0 = inlined_call_operand.vmem [shape: f32[24,3], index: 0, kind: input, shape index: {}]
  %s1 = inlined_call_operand.vmem [shape: f32[1,128], index: 1, kind: input, shape index: {}]
  %s2 = inlined_call_operand.hbm [shape: f32[24,128], index: 2, kind: output, shape index: {}]
  %s3 = sld [smem:[#allocation0]]
  $region18: #{tpu_custom_call.1} parent=0
    _
  %s5 = ssub.s32 1, %s3
  %s6 = scalar_select 0, %s5, %s3
  $region1: #{tpu_custom_call.1} parent=0
    #allocation2 [shape = 'u8[12288]{0}', space=vmem, size = 0x3000, scoped, tag = 'output window, operand 0, single buffered']
    #allocation3 [shape = 's32[1]{0}', space=sflag, size = 0x4, scoped, tag = 'scoped memory for tpu_custom_call.1']
    %7 = vsyncpa [#allocation3], 0
    // Predicated region
    $region2: #{tpu_custom_call.1} parent=1 // pred_check
      _
    $region3: #{tpu_custom_call.1} parent=1 // pred_check_branch
      %9 = sbr.rel (0) target = $region5
    $region4: #{tpu_custom_call.1} parent=1 // pred_region
      _
    $region5: #{tpu_custom_call.1} parent=1 // pred_fallthru
      _
    // Predicated region
    $region6: #{tpu_custom_call.1} parent=1 // pred_check
      _
    $region7: #{tpu_custom_call.1} parent=1 // pred_check_branch
      %11 = sbr.rel (0) target = $region9
    $region8: #{tpu_custom_call.1} parent=1 // pred_region
      _
    $region9: #{tpu_custom_call.1} parent=1 // pred_fallthru
      _
    %v12 = vld [vmem:[%s0] sm:$0xff]
    %v13 = vld [vmem:[%s0 + $0x8] sm:$0xff]
    %v14 = vld [vmem:[%s0 + $0x10] sm:$0xff]
    %v15 = vld [vmem:[%s1] sm:$0x1]
    %v16 = vsub.f32 0.0, %v15
    %v18 = vlaneseq
    %v19 = vshrl.u32 %v18, 7
    %v20 = vsub.s32 0, %v19
    %v21 = vrot.slane %v16, %v20
    %24 = vset.pattern.permute.xlu0 2
    %25 = vperm.xlu0 %24, %v12
    %v26 = vpop.permute.xlu0 %25
    %29 = vset.pattern.permute.xlu0 2
    %30 = vperm.xlu0 %29, %v13
    %v31 = vpop.permute.xlu0 %30
    %34 = vset.pattern.permute.xlu0 2
    %35 = vperm.xlu0 %34, %v14
    %v36 = vpop.permute.xlu0 %35
    %v38 = vsub.f32 %v21, %v26
    %v39 = vsub.f32 %v21, %v31
    %v40 = vsub.f32 %v21, %v36
    %v41 = vrcp.pop %v38
    %v42 = vrcp.pop %v39
    %v43 = vrcp.pop %v40
    %v44 = vmul.f32 %v38, %v41
    %v45 = vmul.f32 %v39, %v42
    %v46 = vmul.f32 %v40, %v43
    %v47 = vsub.f32 2.0, %v44
    %v48 = vsub.f32 2.0, %v45
    %v49 = vsub.f32 2.0, %v46
    %v50 = vmul.f32 %v41, %v47
    %v51 = vmul.f32 %v42, %v48
    %v52 = vmul.f32 %v43, %v49
    %53 = vset.pattern.permute.xlu0 1
    %54 = vperm.xlu0 %53, %v12
    %v55 = vpop.permute.xlu0 %54
    %57 = vset.pattern.permute.xlu0 1
    %58 = vperm.xlu0 %57, %v13
    %v59 = vpop.permute.xlu0 %58
    %61 = vset.pattern.permute.xlu0 1
    %62 = vperm.xlu0 %61, %v14
    %v63 = vpop.permute.xlu0 %62
    %v65 = vmul.f32 %v55, %v50
    %v66 = vmul.f32 %v59, %v51
    %v67 = vmul.f32 %v63, %v52
    %68 = vset.pattern.permute.xlu0 0
    %69 = vperm.xlu0 %68, %v12
    %v70 = vpop.permute.xlu0 %69
    %72 = vset.pattern.permute.xlu0 0
    %73 = vperm.xlu0 %72, %v13
    %v74 = vpop.permute.xlu0 %73
    %76 = vset.pattern.permute.xlu0 0
    %77 = vperm.xlu0 %76, %v14
    %v78 = vpop.permute.xlu0 %77
    %v80 = vadd.f32 %v70, %v65
    %v81 = vadd.f32 %v74, %v66
    %v82 = vadd.f32 %v78, %v67
    %83 = vst [vmem:[#allocation2] sm:$0xff] %v80
    %84 = vst [vmem:[#allocation2 + $0x8] sm:$0xff] %v81
    %85 = vst [vmem:[#allocation2 + $0x10] sm:$0xff] %v82
    // Predicated region
    $region10: #{tpu_custom_call.1} parent=1 // pred_check
      _
    $region11: #{tpu_custom_call.1} parent=1 // pred_check_branch
      %87 = sbr.rel (0) target = $region13
    $region12: #{tpu_custom_call.1} parent=1 // pred_region
      %s89 = ssub.s32 384, 384
      %90 = vsyncadd [#allocation3], %s89
      %s91 = sshll.u32 [#allocation2], 4
      %s92 = int_to_ptr.vmem [resolvable:$true] %s91
      %97 = dma.vmem_to_hbm [thread:$0]  %s92, 384, %s2, [#allocation3], 128, 128, 8
    $region13: #{tpu_custom_call.1} parent=1 // pred_fallthru
      _
    // Predicated region
    $region14: #{tpu_custom_call.1} parent=1 // pred_check
      _
    $region15: #{tpu_custom_call.1} parent=1 // pred_check_branch
      %99 = sbr.rel (0) target = $region17
    $region16: #{tpu_custom_call.1} parent=1 // pred_region
      %100 = dma.done [#allocation3], 384
    $region17: #{tpu_custom_call.1} parent=1 // pred_fallthru
      _
    %101 = vsyncpa [#allocation3], 1

</llo_original>
